<compile_context>
chip_gen: v6e
topology: v6e:2x2x1
jax: 0.10.0
libtpu: 0.0.40
codegen_flags: <defaults>
</compile_context>

<pallas_src>
import functools

import jax
import jax.numpy as jnp
from jax import lax
from jax.experimental import pallas as pl
from jax.experimental.pallas import tpu as pltpu


# ---------------------------------------------------------------------------
# Kernel 1: one-hot mask + negated max-margin errors (elementwise, tiled).
# ---------------------------------------------------------------------------
def one_hot_neg_error_kernel(inp_ref, tgt_ref, neg_ref, msk_ref):
    """inp: (1,C,T) f32, tgt: (1,1,T) i32 -> neg: (1,C,T) f32, msk: (1,C,T) i8.

    neg = -(1 - (2*mask - 1) * input)   (negated so an ascending sort is descending-error)
    msk = one-hot(target) along C       (== torch scatter_ along dim=1), stored as int8.
    """
    inp = inp_ref[...]
    tgt = tgt_ref[...]                                   # (1,1,T) broadcasts over C
    ch = lax.broadcasted_iota(jnp.int32, inp.shape, 1)
    is_hot = ch == tgt
    neg_ref[...] = jnp.where(is_hot, inp, -inp) - 1.0
    msk_ref[...] = is_hot.astype(jnp.int8)


# ---------------------------------------------------------------------------
# Kernel 2: streaming Lovasz-gradient dot reduction over sorted errors/labels.
# ---------------------------------------------------------------------------
def lovasz_reduce_kernel(neg_ref, lbl_ref, out_ref, carry_ref, ex_ref, acc_ref,
                         *, gts, inv_n):
    """neg/lbl blocks: (N, SB, 128); out: (1,1) f32 (mean-over-batch loss).

    carry_ref: (N,1,1) f32  running label cumsum from previous blocks
    ex_ref   : (N,SB,1) f32 per-row exclusive prefixes within this block
    acc_ref  : (1,1)  f32   running sum of relu(err) * lovasz_grad
    """
    t = pl.program_id(0)
    nb, sb, lanes = lbl_ref.shape

    @pl.when(t == 0)
    def _init():
        carry_ref[...] = jnp.zeros_like(carry_ref)
        acc_ref[...] = jnp.zeros_like(acc_ref)

    lbl = lbl_ref[...].astype(jnp.float32)               # (N,SB,128) {0,1}
    neg = neg_ref[...]                                   # (N,SB,128) negated errors

    # Within-row (128-lane) inclusive cumsum via a batched bf16 matmul on the MXU.
    # Triangular matrix is only 128x128 (no PxP matrix); bf16 is exact for {0,1}.
    li = lax.broadcasted_iota(jnp.int32, (nb, lanes, lanes), 1)
    ki = lax.broadcasted_iota(jnp.int32, (nb, lanes, lanes), 2)
    u = (li <= ki).astype(jnp.bfloat16)
    cs_rows = jnp.einsum('nsl,nlk->nsk', lbl.astype(jnp.bfloat16), u,
                         preferred_element_type=jnp.float32)     # (N,SB,128)

    # Cross-row exclusive prefix inside the block + global carry from earlier blocks.
    row_tot = jnp.sum(lbl, axis=2, keepdims=True)        # (N,SB,1)
    run = carry_ref[...]                                 # (N,1,1)
    for si in range(sb):                                 # SB <= 32, static unroll (tiny ops)
        ex_ref[:, si:si + 1, :] = run
        run = run + row_tot[:, si:si + 1, :]
    carry_ref[...] = run                                 # carry into next block

    cs_l = ex_ref[...] + cs_rows                         # global inclusive cumsum(labels)

    # cumsum(1 - labels) derived arithmetically: cs_nl[k] = (k+1) - cs_l[k].
    s_io = lax.broadcasted_iota(jnp.int32, (1, sb, lanes), 1)
    l_io = lax.broadcasted_iota(jnp.int32, (1, sb, lanes), 2)
    pos1 = (t * (sb * lanes) + s_io * lanes + l_io + 1).astype(jnp.float32)

    inter = gts - cs_l
    union = gts + (pos1 - cs_l)
    iou = 1.0 - inter / union
    # Previous-position IoU in exclusive form; at global k==0 it evaluates to
    # 1 - gts/gts = 0, matching torch's `iou[1:] -= iou[:-1]` boundary.
    iou_prev = 1.0 - (inter + lbl) / (union - (1.0 - lbl))
    grad = iou - iou_prev

    acc_ref[...] += jnp.sum(jnp.maximum(-neg, 0.0) * grad)

    @pl.when(t == pl.num_programs(0) - 1)
    def _finalize():
        out_ref[...] = acc_ref[...] * inv_n


# ---------------------------------------------------------------------------
# Wrapper.
# ---------------------------------------------------------------------------
def _pick_tile(total, max_tile=2048, align=128):
    """Largest tile <= max_tile that divides `total` and is a multiple of 128
    (falls back to the full dimension, which is always a legal block)."""
    if total % align != 0 or total <= max_tile:
        return total
    t = max_tile
    while total % t != 0:
        t -= align
    return t


def lovasz_loss_2d(inputs, targets):
    """JAX/Pallas equivalent of LovaszLoss2d.forward."""
    inputs = inputs.astype(jnp.float32)
    n, c, hi, wi = inputs.shape
    _, h, w = targets.shape
    if (hi, wi) != (h, w):
        # TODO(synk): torch F.upsample(mode='bilinear', default align_corners) edge
        # handling may differ slightly from jax.image.resize half-pixel sampling.
        inputs = jax.image.resize(inputs, (n, c, h, w), method="bilinear")

    hw = h * w
    p = c * hw
    t_hw = _pick_tile(hw)

    inp3 = inputs.reshape(n, c, hw)
    tgt3 = targets.astype(jnp.int32).reshape(n, 1, hw)

    # ---- Kernel 1: tiled, parallel, memory-bound elementwise pass. ----
    neg_err, masks = pl.pallas_call(
        one_hot_neg_error_kernel,
        grid=(n, hw // t_hw),
        out_shape=(
            jax.ShapeDtypeStruct((n, c, hw), jnp.float32),
            jax.ShapeDtypeStruct((n, c, hw), jnp.int8),
        ),
        in_specs=[
            pl.BlockSpec((1, c, t_hw), lambda b, j: (b, 0, j)),
            pl.BlockSpec((1, 1, t_hw), lambda b, j: (b, 0, j)),
        ],
        out_specs=(
            pl.BlockSpec((1, c, t_hw), lambda b, j: (b, 0, j)),
            pl.BlockSpec((1, c, t_hw), lambda b, j: (b, 0, j)),
        ),
        compiler_params=pltpu.CompilerParams(
            dimension_semantics=("parallel", "parallel")),
    )(inp3, tgt3)

    neg_flat = neg_err.reshape(n, p)
    msk_flat = masks.reshape(n, p)

    # ---- Glue: fused key/value sort (ascending negated errors == descending errors).
    # TODO(synk): sort has no clean Pallas/Mosaic lowering; done with lax.sort in XLA.
    neg_sorted, lbl_sorted = lax.sort((neg_flat, msk_flat), dimension=1,
                                      num_keys=1, is_stable=True)

    # ---- Reshape/pad to (N, S, 128) for the streaming reduction kernel. ----
    lanes = 128
    s_total = -(-p // lanes)
    sb = s_total if s_total <= 32 else 32                 # rows per grid step
    s_pad = -(-s_total // sb) * sb
    p_pad = s_pad * lanes
    if p_pad != p:
        # Padding contributes exactly zero: relu(-neg)=0 there and labels are 0.
        neg_sorted = jnp.pad(neg_sorted, ((0, 0), (0, p_pad - p)),
                             constant_values=1e30)
        lbl_sorted = jnp.pad(lbl_sorted, ((0, 0), (0, p_pad - p)),
                             constant_values=0)
    neg3 = neg_sorted.reshape(n, s_pad, lanes)
    lbl3 = lbl_sorted.reshape(n, s_pad, lanes)

    # ---- Kernel 2: streaming cumsum / IoU-gradient / relu-dot with carry. ----
    kernel = functools.partial(lovasz_reduce_kernel,
                               gts=float(hw), inv_n=1.0 / n)
    loss = pl.pallas_call(
        kernel,
        grid=(s_pad // sb,),
        out_shape=jax.ShapeDtypeStruct((1, 1), jnp.float32),
        in_specs=[
            pl.BlockSpec((n, sb, lanes), lambda i: (0, i, 0)),
            pl.BlockSpec((n, sb, lanes), lambda i: (0, i, 0)),
        ],
        out_specs=pl.BlockSpec((1, 1), lambda i: (0, 0)),
        scratch_shapes=[
            pltpu.VMEM((n, 1, 1), jnp.float32),    # carry: running label cumsum
            pltpu.VMEM((n, sb, 1), jnp.float32),   # per-row exclusive prefixes
            pltpu.VMEM((1, 1), jnp.float32),       # loss accumulator
        ],
        compiler_params=pltpu.CompilerParams(
            dimension_semantics=("arbitrary",)),
    )(neg3, lbl3)
    return loss[0, 0]


if __name__ == "__main__":
    key = jax.random.PRNGKey(0)
    k1, k2 = jax.random.split(key)
    N, C, H, W = 2, 4, 16, 16
    inputs = jax.random.normal(k1, (N, C, H, W), dtype=jnp.float32)
    targets = jax.random.randint(k2, (N, H, W), 0, C, dtype=jnp.int32)

    loss = jax.jit(lovasz_loss_2d)(inputs, targets)
    jax.block_until_ready(loss)
    print("KERNEL_OK")
</pallas_src>

<mosaic_0001>
module attributes {stable_mosaic.version = 11 : i64} {
  func.func @one_hot_neg_error_kernel(%arg0: i32, %arg1: i32, %arg2: memref<1x4x256xf32, #tpu.memory_space<vmem>>, %arg3: memref<1x1x256xi32, #tpu.memory_space<vmem>>, %arg4: memref<1x4x256xf32, #tpu.memory_space<vmem>>, %arg5: memref<1x4x256xi8, #tpu.memory_space<vmem>>) attributes {dimension_semantics = [#tpu.dimension_semantics<parallel>, #tpu.dimension_semantics<parallel>], iteration_bounds = array<i64: 2, 1>, scalar_prefetch = 0 : i64, scratch_operands = 0 : i64, tpu.core_type = #tpu.core_type<tc>, window_params = [{transform_indices = @transform_0, window_bounds = array<i64: 1, 4, 256>}, {transform_indices = @transform_1, window_bounds = array<i64: 1, 1, 256>}, {transform_indices = @transform_2, window_bounds = array<i64: 1, 4, 256>}, {transform_indices = @transform_3, window_bounds = array<i64: 1, 4, 256>}]} {
    %c0 = arith.constant 0 : index
    %c0_0 = arith.constant 0 : index
    %c0_1 = arith.constant 0 : index
    %0 = vector.load %arg2[%c0, %c0_0, %c0_1] : memref<1x4x256xf32, #tpu.memory_space<vmem>>, vector<1x4x256xf32>
    %c0_2 = arith.constant 0 : index
    %c0_3 = arith.constant 0 : index
    %c0_4 = arith.constant 0 : index
    %1 = vector.load %arg3[%c0_2, %c0_3, %c0_4] : memref<1x1x256xi32, #tpu.memory_space<vmem>>, vector<1x1x256xi32>
    %2 = tpu.iota {dimensions = array<i32: 1>} : vector<1x4x256xi32>
    %3 = vector.broadcast %1 : vector<1x1x256xi32> to vector<1x4x256xi32>
    %4 = arith.cmpi eq, %2, %3 : vector<1x4x256xi32>
    %cst = arith.constant 0.000000e+00 : f32
    %5 = vector.broadcast %cst : f32 to vector<1x4x256xf32>
    %6 = arith.subf %5, %0 : vector<1x4x256xf32>
    %7 = arith.select %4, %0, %6 : vector<1x4x256xi1>, vector<1x4x256xf32>
    %cst_5 = arith.constant 1.000000e+00 : f32
    %8 = vector.broadcast %cst_5 : f32 to vector<1x4x256xf32>
    %9 = arith.subf %7, %8 : vector<1x4x256xf32>
    %c0_6 = arith.constant 0 : index
    %c0_7 = arith.constant 0 : index
    %c0_8 = arith.constant 0 : index
    %10 = vector.load %arg4[%c0_6, %c0_7, %c0_8] : memref<1x4x256xf32, #tpu.memory_space<vmem>>, vector<1x4x256xf32>
    tpu.vector_store %arg4[%c0_6, %c0_7, %c0_8], %9 {strides = array<i32>} : memref<1x4x256xf32, #tpu.memory_space<vmem>>, vector<1x4x256xf32>,
    %11 = arith.extui %4 : vector<1x4x256xi1> to vector<1x4x256xi8>
    %c0_9 = arith.constant 0 : index
    %c0_10 = arith.constant 0 : index
    %c0_11 = arith.constant 0 : index
    %12 = vector.load %arg5[%c0_9, %c0_10, %c0_11] : memref<1x4x256xi8, #tpu.memory_space<vmem>>, vector<1x4x256xi8>
    tpu.vector_store %arg5[%c0_9, %c0_10, %c0_11], %11 {strides = array<i32>} : memref<1x4x256xi8, #tpu.memory_space<vmem>>, vector<1x4x256xi8>,
    return
  }
  func.func @transform_0(%arg0: i32, %arg1: i32) -> (i32, i32, i32) {
    %c0_i32 = arith.constant 0 : i32
    %c0_i32_0 = arith.constant 0 : i32
    return %arg0, %c0_i32, %arg1 : i32, i32, i32
  }
  func.func @transform_1(%arg0: i32, %arg1: i32) -> (i32, i32, i32) {
    %c0_i32 = arith.constant 0 : i32
    %c0_i32_0 = arith.constant 0 : i32
    return %arg0, %c0_i32, %arg1 : i32, i32, i32
  }
  func.func @transform_2(%arg0: i32, %arg1: i32) -> (i32, i32, i32) {
    %c0_i32 = arith.constant 0 : i32
    %c0_i32_0 = arith.constant 0 : i32
    return %arg0, %c0_i32, %arg1 : i32, i32, i32
  }
  func.func @transform_3(%arg0: i32, %arg1: i32) -> (i32, i32, i32) {
    %c0_i32 = arith.constant 0 : i32
    %c0_i32_0 = arith.constant 0 : i32
    return %arg0, %c0_i32, %arg1 : i32, i32, i32
  }
}

module attributes {stable_mosaic.version = 11 : i64} {
  func.func @lovasz_reduce_kernel(%arg0: i32, %arg1: memref<2x8x128xf32, #tpu.memory_space<vmem>>, %arg2: memref<2x8x128xi8, #tpu.memory_space<vmem>>, %arg3: memref<1x1xf32, #tpu.memory_space<vmem>>, %arg4: memref<2x1x1xf32, #tpu.memory_space<vmem>>, %arg5: memref<2x8x1xf32, #tpu.memory_space<vmem>>, %arg6: memref<1x1xf32, #tpu.memory_space<vmem>>) attributes {dimension_semantics = [#tpu.dimension_semantics<arbitrary>], iteration_bounds = array<i64: 1>, scalar_prefetch = 0 : i64, scratch_operands = 3 : i64, tpu.core_type = #tpu.core_type<tc>, window_params = [{transform_indices = @transform_0, window_bounds = array<i64: 2, 8, 128>}, {transform_indices = @transform_1, window_bounds = array<i64: 2, 8, 128>}, {pipeline_mode = #tpu.pipeline_mode<synchronous>, transform_indices = @transform_2, window_bounds = array<i64: 1, 1>}]} {
    %c0_i32 = arith.constant 0 : i32
    %0 = arith.cmpi eq, %arg0, %c0_i32 : i32
    %1 = arith.extui %0 : i1 to i32
    %c0_i32_0 = arith.constant 0 : i32
    %2 = arith.cmpi ne, %1, %c0_i32_0 : i32
    scf.if %2 {
      %cst_47 = arith.constant 0.000000e+00 : f32
      %89 = vector.broadcast %cst_47 : f32 to vector<2x1x1xf32>
      %c0_48 = arith.constant 0 : index
      %c0_49 = arith.constant 0 : index
      %c0_50 = arith.constant 0 : index
      %90 = vector.load %arg4[%c0_48, %c0_49, %c0_50] : memref<2x1x1xf32, #tpu.memory_space<vmem>>, vector<2x1x1xf32>
      tpu.vector_store %arg4[%c0_48, %c0_49, %c0_50], %89 {strides = array<i32>} : memref<2x1x1xf32, #tpu.memory_space<vmem>>, vector<2x1x1xf32>,
      %cst_51 = arith.constant 0.000000e+00 : f32
      %91 = vector.broadcast %cst_51 : f32 to vector<1x1xf32>
      %c0_52 = arith.constant 0 : index
      %c0_53 = arith.constant 0 : index
      %92 = vector.load %arg6[%c0_52, %c0_53] : memref<1x1xf32, #tpu.memory_space<vmem>>, vector<1x1xf32>
      tpu.vector_store %arg6[%c0_52, %c0_53], %91 {strides = array<i32>} : memref<1x1xf32, #tpu.memory_space<vmem>>, vector<1x1xf32>,
    } else {
    }
    %c0 = arith.constant 0 : index
    %c0_1 = arith.constant 0 : index
    %c0_2 = arith.constant 0 : index
    %3 = vector.load %arg2[%c0, %c0_1, %c0_2] : memref<2x8x128xi8, #tpu.memory_space<vmem>>, vector<2x8x128xi8>
    %4 = arith.sitofp %3 : vector<2x8x128xi8> to vector<2x8x128xf32>
    %c0_3 = arith.constant 0 : index
    %c0_4 = arith.constant 0 : index
    %c0_5 = arith.constant 0 : index
    %5 = vector.load %arg1[%c0_3, %c0_4, %c0_5] : memref<2x8x128xf32, #tpu.memory_space<vmem>>, vector<2x8x128xf32>
    %6 = tpu.iota {dimensions = array<i32: 1>} : vector<2x128x128xi32>
    %7 = tpu.iota {dimensions = array<i32: 2>} : vector<2x128x128xi32>
    %8 = arith.cmpi sle, %6, %7 : vector<2x128x128xi32>
    %9 = arith.extui %8 : vector<2x128x128xi1> to vector<2x128x128xi32>
    %10 = arith.sitofp %9 : vector<2x128x128xi32> to vector<2x128x128xf32>
    %11 = arith.truncf %10 : vector<2x128x128xf32> to vector<2x128x128xbf16>
    %12 = arith.truncf %4 : vector<2x8x128xf32> to vector<2x8x128xbf16>
    "tpu.trace_start"() <{level = 10 : i32, message = "nsl,nlk->nsk"}> : () -> ()
    %cst = arith.constant dense<0.000000e+00> : vector<2x8x128xf32>
    %13 = tpu.matmul %12, %11, %cst {dimension_numbers = #tpu.dot_dimension_numbers<[2], [1], [1], [2], [0, 0, 0, 1, 1, 2], [0], [0]>} : vector<2x8x128xbf16>, vector<2x128x128xbf16>, vector<2x8x128xf32> -> vector<2x8x128xf32>
    "tpu.trace_stop"() : () -> ()
    %cst_6 = arith.constant dense<0.000000e+00> : vector<2x8xf32>
    %14 = vector.multi_reduction <add>, %4, %cst_6 [2] : vector<2x8x128xf32> to vector<2x8xf32>
    %15 = vector.shape_cast %14 : vector<2x8xf32> to vector<2x8x1xf32>
    %c0_7 = arith.constant 0 : index
    %c0_8 = arith.constant 0 : index
    %c0_9 = arith.constant 0 : index
    %16 = vector.load %arg4[%c0_7, %c0_8, %c0_9] : memref<2x1x1xf32, #tpu.memory_space<vmem>>, vector<2x1x1xf32>
    %c0_10 = arith.constant 0 : index
    %c0_11 = arith.constant 0 : index
    %c0_12 = arith.constant 0 : index
    %17 = vector.load %arg5[%c0_10, %c0_11, %c0_12] : memref<2x8x1xf32, #tpu.memory_space<vmem>>, vector<2x1x1xf32>
    tpu.vector_store %arg5[%c0_10, %c0_11, %c0_12], %16 {strides = array<i32>} : memref<2x8x1xf32, #tpu.memory_space<vmem>>, vector<2x1x1xf32>,
    %18 = vector.extract_strided_slice %15 {offsets = [0, 0, 0], sizes = [2, 1, 1], strides = [1, 1, 1]} : vector<2x8x1xf32> to vector<2x1x1xf32>
    %19 = arith.addf %16, %18 : vector<2x1x1xf32>
    %c0_13 = arith.constant 0 : index
    %c1 = arith.constant 1 : index
    %c0_14 = arith.constant 0 : index
    %20 = vector.load %arg5[%c0_13, %c1, %c0_14] : memref<2x8x1xf32, #tpu.memory_space<vmem>>, vector<2x1x1xf32>
    tpu.vector_store %arg5[%c0_13, %c1, %c0_14], %19 {strides = array<i32>} : memref<2x8x1xf32, #tpu.memory_space<vmem>>, vector<2x1x1xf32>,
    %21 = vector.extract_strided_slice %15 {offsets = [0, 1, 0], sizes = [2, 1, 1], strides = [1, 1, 1]} : vector<2x8x1xf32> to vector<2x1x1xf32>
    %22 = arith.addf %19, %21 : vector<2x1x1xf32>
    %c0_15 = arith.constant 0 : index
    %c2 = arith.constant 2 : index
    %c0_16 = arith.constant 0 : index
    %23 = vector.load %arg5[%c0_15, %c2, %c0_16] : memref<2x8x1xf32, #tpu.memory_space<vmem>>, vector<2x1x1xf32>
    tpu.vector_store %arg5[%c0_15, %c2, %c0_16], %22 {strides = array<i32>} : memref<2x8x1xf32, #tpu.memory_space<vmem>>, vector<2x1x1xf32>,
    %24 = vector.extract_strided_slice %15 {offsets = [0, 2, 0], sizes = [2, 1, 1], strides = [1, 1, 1]} : vector<2x8x1xf32> to vector<2x1x1xf32>
    %25 = arith.addf %22, %24 : vector<2x1x1xf32>
    %c0_17 = arith.constant 0 : index
    %c3 = arith.constant 3 : index
    %c0_18 = arith.constant 0 : index
    %26 = vector.load %arg5[%c0_17, %c3, %c0_18] : memref<2x8x1xf32, #tpu.memory_space<vmem>>, vector<2x1x1xf32>
    tpu.vector_store %arg5[%c0_17, %c3, %c0_18], %25 {strides = array<i32>} : memref<2x8x1xf32, #tpu.memory_space<vmem>>, vector<2x1x1xf32>,
    %27 = vector.extract_strided_slice %15 {offsets = [0, 3, 0], sizes = [2, 1, 1], strides = [1, 1, 1]} : vector<2x8x1xf32> to vector<2x1x1xf32>
    %28 = arith.addf %25, %27 : vector<2x1x1xf32>
    %c0_19 = arith.constant 0 : index
    %c4 = arith.constant 4 : index
    %c0_20 = arith.constant 0 : index
    %29 = vector.load %arg5[%c0_19, %c4, %c0_20] : memref<2x8x1xf32, #tpu.memory_space<vmem>>, vector<2x1x1xf32>
    tpu.vector_store %arg5[%c0_19, %c4, %c0_20], %28 {strides = array<i32>} : memref<2x8x1xf32, #tpu.memory_space<vmem>>, vector<2x1x1xf32>,
    %30 = vector.extract_strided_slice %15 {offsets = [0, 4, 0], sizes = [2, 1, 1], strides = [1, 1, 1]} : vector<2x8x1xf32> to vector<2x1x1xf32>
    %31 = arith.addf %28, %30 : vector<2x1x1xf32>
    %c0_21 = arith.constant 0 : index
    %c5 = arith.constant 5 : index
    %c0_22 = arith.constant 0 : index
    %32 = vector.load %arg5[%c0_21, %c5, %c0_22] : memref<2x8x1xf32, #tpu.memory_space<vmem>>, vector<2x1x1xf32>
    tpu.vector_store %arg5[%c0_21, %c5, %c0_22], %31 {strides = array<i32>} : memref<2x8x1xf32, #tpu.memory_space<vmem>>, vector<2x1x1xf32>,
    %33 = vector.extract_strided_slice %15 {offsets = [0, 5, 0], sizes = [2, 1, 1], strides = [1, 1, 1]} : vector<2x8x1xf32> to vector<2x1x1xf32>
    %34 = arith.addf %31, %33 : vector<2x1x1xf32>
    %c0_23 = arith.constant 0 : index
    %c6 = arith.constant 6 : index
    %c0_24 = arith.constant 0 : index
    %35 = vector.load %arg5[%c0_23, %c6, %c0_24] : memref<2x8x1xf32, #tpu.memory_space<vmem>>, vector<2x1x1xf32>
    tpu.vector_store %arg5[%c0_23, %c6, %c0_24], %34 {strides = array<i32>} : memref<2x8x1xf32, #tpu.memory_space<vmem>>, vector<2x1x1xf32>,
    %36 = vector.extract_strided_slice %15 {offsets = [0, 6, 0], sizes = [2, 1, 1], strides = [1, 1, 1]} : vector<2x8x1xf32> to vector<2x1x1xf32>
    %37 = arith.addf %34, %36 : vector<2x1x1xf32>
    %c0_25 = arith.constant 0 : index
    %c7 = arith.constant 7 : index
    %c0_26 = arith.constant 0 : index
    %38 = vector.load %arg5[%c0_25, %c7, %c0_26] : memref<2x8x1xf32, #tpu.memory_space<vmem>>, vector<2x1x1xf32>
    tpu.vector_store %arg5[%c0_25, %c7, %c0_26], %37 {strides = array<i32>} : memref<2x8x1xf32, #tpu.memory_space<vmem>>, vector<2x1x1xf32>,
    %39 = vector.extract_strided_slice %15 {offsets = [0, 7, 0], sizes = [2, 1, 1], strides = [1, 1, 1]} : vector<2x8x1xf32> to vector<2x1x1xf32>
    %40 = arith.addf %37, %39 : vector<2x1x1xf32>
    %c0_27 = arith.constant 0 : index
    %c0_28 = arith.constant 0 : index
    %c0_29 = arith.constant 0 : index
    %41 = vector.load %arg4[%c0_27, %c0_28, %c0_29] : memref<2x1x1xf32, #tpu.memory_space<vmem>>, vector<2x1x1xf32>
    tpu.vector_store %arg4[%c0_27, %c0_28, %c0_29], %40 {strides = array<i32>} : memref<2x1x1xf32, #tpu.memory_space<vmem>>, vector<2x1x1xf32>,
    %c0_30 = arith.constant 0 : index
    %c0_31 = arith.constant 0 : index
    %c0_32 = arith.constant 0 : index
    %42 = vector.load %arg5[%c0_30, %c0_31, %c0_32] : memref<2x8x1xf32, #tpu.memory_space<vmem>>, vector<2x8x1xf32>
    %43 = vector.broadcast %42 : vector<2x8x1xf32> to vector<2x8x128xf32>
    %44 = arith.addf %43, %13 : vector<2x8x128xf32>
    %45 = tpu.iota {dimensions = array<i32: 1>} : vector<1x8x128xi32>
    %46 = tpu.iota {dimensions = array<i32: 2>} : vector<1x8x128xi32>
    %c1024_i32 = arith.constant 1024 : i32
    %47 = arith.muli %arg0, %c1024_i32 : i32
    %c128_i32 = arith.constant 128 : i32
    %48 = vector.broadcast %c128_i32 : i32 to vector<1x8x128xi32>
    %49 = arith.muli %45, %48 : vector<1x8x128xi32>
    %50 = vector.broadcast %47 : i32 to vector<1x8x128xi32>
    %51 = arith.addi %50, %49 : vector<1x8x128xi32>
    %52 = arith.addi %51, %46 : vector<1x8x128xi32>
    %c1_i32 = arith.constant 1 : i32
    %53 = vector.broadcast %c1_i32 : i32 to vector<1x8x128xi32>
    %54 = arith.addi %52, %53 : vector<1x8x128xi32>
    %55 = arith.sitofp %54 : vector<1x8x128xi32> to vector<1x8x128xf32>
    %cst_33 = arith.constant 2.560000e+02 : f32
    %56 = vector.broadcast %cst_33 : f32 to vector<2x8x128xf32>
    %57 = arith.subf %56, %44 : vector<2x8x128xf32>
    %58 = vector.broadcast %55 : vector<1x8x128xf32> to vector<2x8x128xf32>
    %59 = arith.subf %58, %44 : vector<2x8x128xf32>
    %cst_34 = arith.constant 2.560000e+02 : f32
    %60 = vector.broadcast %cst_34 : f32 to vector<2x8x128xf32>
    %61 = arith.addf %60, %59 : vector<2x8x128xf32>
    %62 = arith.divf %57, %61 : vector<2x8x128xf32>
    %cst_35 = arith.constant 1.000000e+00 : f32
    %63 = vector.broadcast %cst_35 : f32 to vector<2x8x128xf32>
    %64 = arith.subf %63, %62 : vector<2x8x128xf32>
    %65 = arith.addf %57, %4 : vector<2x8x128xf32>
    %cst_36 = arith.constant 1.000000e+00 : f32
    %66 = vector.broadcast %cst_36 : f32 to vector<2x8x128xf32>
    %67 = arith.subf %66, %4 : vector<2x8x128xf32>
    %68 = arith.subf %61, %67 : vector<2x8x128xf32>
    %69 = arith.divf %65, %68 : vector<2x8x128xf32>
    %cst_37 = arith.constant 1.000000e+00 : f32
    %70 = vector.broadcast %cst_37 : f32 to vector<2x8x128xf32>
    %71 = arith.subf %70, %69 : vector<2x8x128xf32>
    %72 = arith.subf %64, %71 : vector<2x8x128xf32>
    %c0_38 = arith.constant 0 : index
    %c0_39 = arith.constant 0 : index
    %73 = vector.load %arg6[%c0_38, %c0_39] : memref<1x1xf32, #tpu.memory_space<vmem>>, vector<1x1xf32>
    %cst_40 = arith.constant 0.000000e+00 : f32
    %74 = vector.broadcast %cst_40 : f32 to vector<2x8x128xf32>
    %75 = arith.subf %74, %5 : vector<2x8x128xf32>
    %cst_41 = arith.constant 0.000000e+00 : f32
    %76 = vector.broadcast %cst_41 : f32 to vector<2x8x128xf32>
    %77 = arith.maximumf %75, %76 : vector<2x8x128xf32>
    %78 = arith.mulf %77, %72 : vector<2x8x128xf32>
    %79 = vector.shape_cast %78 : vector<2x8x128xf32> to vector<1x2x8x128xf32>
    %cst_42 = arith.constant dense<0.000000e+00> : vector<1xf32>
    %80 = vector.multi_reduction <add>, %79, %cst_42 [1, 2, 3] : vector<1x2x8x128xf32> to vector<1xf32>
    %81 = vector.shape_cast %80 : vector<1xf32> to vector<1x1x1x1xf32>
    %82 = vector.extract %81[0, 0, 0, 0] : f32 from vector<1x1x1x1xf32>
    %83 = vector.broadcast %82 : f32 to vector<1x1xf32>
    %84 = arith.addf %73, %83 : vector<1x1xf32>
    %c0_43 = arith.constant 0 : index
    %c0_44 = arith.constant 0 : index
    %85 = vector.load %arg6[%c0_43, %c0_44] : memref<1x1xf32, #tpu.memory_space<vmem>>, vector<1x1xf32>
    tpu.vector_store %arg6[%c0_43, %c0_44], %84 {strides = array<i32>} : memref<1x1xf32, #tpu.memory_space<vmem>>, vector<1x1xf32>,
    %c0_i32_45 = arith.constant 0 : i32
    %86 = arith.cmpi eq, %arg0, %c0_i32_45 : i32
    %87 = arith.extui %86 : i1 to i32
    %c0_i32_46 = arith.constant 0 : i32
    %88 = arith.cmpi ne, %87, %c0_i32_46 : i32
    scf.if %88 {
      %c0_47 = arith.constant 0 : index
      %c0_48 = arith.constant 0 : index
      %89 = vector.load %arg6[%c0_47, %c0_48] : memref<1x1xf32, #tpu.memory_space<vmem>>, vector<1x1xf32>
      %cst_49 = arith.constant 5.000000e-01 : f32
      %90 = vector.broadcast %cst_49 : f32 to vector<1x1xf32>
      %91 = arith.mulf %89, %90 : vector<1x1xf32>
      %c0_50 = arith.constant 0 : index
      %c0_51 = arith.constant 0 : index
      %92 = vector.load %arg3[%c0_50, %c0_51] : memref<1x1xf32, #tpu.memory_space<vmem>>, vector<1x1xf32>
      tpu.vector_store %arg3[%c0_50, %c0_51], %91 {strides = array<i32>} : memref<1x1xf32, #tpu.memory_space<vmem>>, vector<1x1xf32>,
    } else {
    }
    return
  }
  func.func @transform_0(%arg0: i32) -> (i32, i32, i32) {
    %c0_i32 = arith.constant 0 : i32
    %c0_i32_0 = arith.constant 0 : i32
    %c0_i32_1 = arith.constant 0 : i32
    return %c0_i32, %arg0, %c0_i32_0 : i32, i32, i32
  }
  func.func @transform_1(%arg0: i32) -> (i32, i32, i32) {
    %c0_i32 = arith.constant 0 : i32
    %c0_i32_0 = arith.constant 0 : i32
    %c0_i32_1 = arith.constant 0 : i32
    return %c0_i32, %arg0, %c0_i32_0 : i32, i32, i32
  }
  func.func @transform_2(%arg0: i32) -> (i32, i32) {
    %c0_i32 = arith.constant 0 : i32
    %c0_i32_0 = arith.constant 0 : i32
    %c0_i32_1 = arith.constant 0 : i32
    return %c0_i32, %c0_i32_0 : i32, i32
  }
}

</mosaic_0001>

<llo_original>
// kernel: lovasz_loss_2d.2
$region0: #{lovasz_loss_2d.2}
  #allocation0 [shape = 'u32[]', space=smem, size = 0x4, offset = 0x4, fixed_abs, tag = 'smem constant byte address 0x4 - core index']
  #allocation1 [shape = 'u32[144,128]{1,0:T(1,128)}', space=vmem, size = 0x12000, scoped, tag = 'internal scratch']
  %s0 = inlined_call_operand.vmem [shape: f32[2,4,256], index: 0, kind: input, shape index: {}]
  %s1 = inlined_call_operand.vmem [shape: s32[2,1,256], index: 1, kind: input, shape index: {}]
  %s2 = inlined_call_operand.vmem [shape: f32[2,4,256], index: 2, kind: output, shape index: {0}]
  %s3 = inlined_call_operand.vmem [shape: s8[2,4,256], index: 3, kind: output, shape index: {1}]
  %4 = xla_tuple %s2, %s3
  %s5 = sld [smem:[#allocation0]]
  $region49: #{lovasz_loss_2d.2} parent=0
    _
  %s7 = ssub.s32 1, %s5
  %s8 = scalar_select 0, %s7, %s5
  loop: start=0, step=1, limit=4
  $region2: #{lovasz_loss_2d.2} parent=0 // loop_pre_header
    _
  $region3: #{lovasz_loss_2d.2} parent=0 // loop_header
    %s10 = sphi 0, %s14
    %p11 = scmp.ge.s32.totalorder %s10, 4
    %s17 = sphi 0, %s29
    %s18 = sphi 0, %s25
    %s19 = sphi 0, %s17
    %s20 = sphi 0, %s18
    %s21 = sphi 0, %s19
    %s22 = sphi 0, %s20
    %s34 = sphi 0, %s36
    %s37 = sphi 0, %s34
    %s38 = sphi 0, %s37
    %s54 = sphi 0, %s38
    %s62 = sphi 0, %s64
    %s65 = sphi 0, %s62
    %s66 = sphi 0, %s65
    %s82 = sphi 0, %s66
    %s90 = sphi 0, %s92
    %s93 = sphi 0, %s90
    %s94 = sphi 0, %s93
    %s110 = sphi 0, %s94
    %s118 = sphi 0, %s120
    %s121 = sphi 0, %s118
    %s122 = sphi 0, %s121
    %s138 = sphi 0, %s122
  $region4: #{lovasz_loss_2d.2} parent=0 // loop_header_branch
    %13 = sbr.rel (%p11) target = $region8
  $region5: #{lovasz_loss_2d.2} parent=0 // loop_body
    %s15 = ssub.s32 %s10, 1
    %s16 = ssub.s32 %s10, 2
    %s23 = sadd.s32 1, %s18
    %p24 = scmp.ge.s32.totalorder %s23, 1
    %s25 = scalar_select %p24, 0, %s23
    %s26 = sadd.s32 1, %s17
    %s27 = scalar_select %p24, %s26, %s17
    %p28 = scmp.ge.s32.totalorder %s27, 2
    %s29 = scalar_select %p28, 0, %s27
    %s30 = ssub.s32 %s17, %s29
    %s31 = ssub.s32 %s18, %s25
    %s32 = sor.u32 %s30, %s31
    %p33 = scmp.eq.s32.totalorder %s32, 0
    %s35 = sadd.s32 %s34, 1
    %s36 = scalar_select %p33, %s34, %s35
    %p39 = pneg %p33
    %p40 = scmp.eq.s32.totalorder %s10, 1
    %p41 = por %p39, %p40
    %p42 = scmp.ne.s32.totalorder %s34, %s37
    %p43 = scmp.eq.s32.totalorder %s10, 0
    %p44 = por %p42, %p43
    %p45 = scmp.ne.s32.totalorder %s34, %s37
    %p46 = scmp.eq.s32.totalorder %s15, 1
    %p47 = por %p45, %p46
    %p48 = scmp.ne.s32.totalorder %s37, %s38
    %p49 = scmp.eq.s32.totalorder %s15, 0
    %p50 = por %p48, %p49
    %p51 = scmp.ne.s32.totalorder %s37, %s38
    %p52 = scmp.eq.s32.totalorder %s16, 1
    %p53 = por %p51, %p52
    %p55 = scmp.ne.s32.totalorder %s38, %s54
    %p56 = scmp.eq.s32.totalorder %s16, 0
    %p57 = por %p55, %p56
    %s58 = ssub.s32 %s17, %s29
    %s59 = ssub.s32 %s18, %s25
    %s60 = sor.u32 %s58, %s59
    %p61 = scmp.eq.s32.totalorder %s60, 0
    %s63 = sadd.s32 %s62, 1
    %s64 = scalar_select %p61, %s62, %s63
    %p67 = pneg %p61
    %p68 = scmp.eq.s32.totalorder %s10, 1
    %p69 = por %p67, %p68
    %p70 = scmp.ne.s32.totalorder %s62, %s65
    %p71 = scmp.eq.s32.totalorder %s10, 0
    %p72 = por %p70, %p71
    %p73 = scmp.ne.s32.totalorder %s62, %s65
    %p74 = scmp.eq.s32.totalorder %s15, 1
    %p75 = por %p73, %p74
    %p76 = scmp.ne.s32.totalorder %s65, %s66
    %p77 = scmp.eq.s32.totalorder %s15, 0
    %p78 = por %p76, %p77
    %p79 = scmp.ne.s32.totalorder %s65, %s66
    %p80 = scmp.eq.s32.totalorder %s16, 1
    %p81 = por %p79, %p80
    %p83 = scmp.ne.s32.totalorder %s66, %s82
    %p84 = scmp.eq.s32.totalorder %s16, 0
    %p85 = por %p83, %p84
    %s86 = ssub.s32 %s17, %s29
    %s87 = ssub.s32 %s18, %s25
    %s88 = sor.u32 %s86, %s87
    %p89 = scmp.eq.s32.totalorder %s88, 0
    %s91 = sadd.s32 %s90, 1
    %s92 = scalar_select %p89, %s90, %s91
    %p95 = pneg %p89
    %p96 = scmp.eq.s32.totalorder %s10, 1
    %p97 = por %p95, %p96
    %p98 = scmp.ne.s32.totalorder %s90, %s93
    %p99 = scmp.eq.s32.totalorder %s10, 0
    %p100 = por %p98, %p99
    %p101 = scmp.ne.s32.totalorder %s90, %s93
    %p102 = scmp.eq.s32.totalorder %s15, 1
    %p103 = por %p101, %p102
    %p104 = scmp.ne.s32.totalorder %s93, %s94
    %p105 = scmp.eq.s32.totalorder %s15, 0
    %p106 = por %p104, %p105
    %p107 = scmp.ne.s32.totalorder %s93, %s94
    %p108 = scmp.eq.s32.totalorder %s16, 1
    %p109 = por %p107, %p108
    %p111 = scmp.ne.s32.totalorder %s94, %s110
    %p112 = scmp.eq.s32.totalorder %s16, 0
    %p113 = por %p111, %p112
    %s114 = ssub.s32 %s17, %s29
    %s115 = ssub.s32 %s18, %s25
    %s116 = sor.u32 %s114, %s115
    %p117 = scmp.eq.s32.totalorder %s116, 0
    %s119 = sadd.s32 %s118, 1
    %s120 = scalar_select %p117, %s118, %s119
    %p123 = pneg %p117
    %p124 = scmp.eq.s32.totalorder %s10, 1
    %p125 = por %p123, %p124
    %p126 = scmp.ne.s32.totalorder %s118, %s121
    %p127 = scmp.eq.s32.totalorder %s10, 0
    %p128 = por %p126, %p127
    %p129 = scmp.ne.s32.totalorder %s118, %s121
    %p130 = scmp.eq.s32.totalorder %s15, 1
    %p131 = por %p129, %p130
    %p132 = scmp.ne.s32.totalorder %s121, %s122
    %p133 = scmp.eq.s32.totalorder %s15, 0
    %p134 = por %p132, %p133
    %p135 = scmp.ne.s32.totalorder %s121, %s122
    %p136 = scmp.eq.s32.totalorder %s16, 1
    %p137 = por %p135, %p136
    %p139 = scmp.ne.s32.totalorder %s122, %s138
    %p140 = scmp.eq.s32.totalorder %s16, 0
    %p141 = por %p139, %p140
    %p142 = scmp.le.s32.totalorder 1, %s10
    %p143 = scmp.lt.s32.totalorder %s10, 3
    %p144 = pnand %p142, %p143
    %p145 = pneg %p144
    // Predicated region
    $region9: #{lovasz_loss_2d.2} parent=5 // pred_check
      _
    $region10: #{lovasz_loss_2d.2} parent=5 // pred_check_branch
      %147 = sbr.rel (%p144) target = $region12
    $region11: #{lovasz_loss_2d.2} parent=5 // pred_region
      %s148 = ssub.s32 %s10, 1
    $region12: #{lovasz_loss_2d.2} parent=5 // pred_fallthru
      _
    %p149 = scmp.lt.s32.totalorder %s10, 2
    // Predicated region
    $region13: #{lovasz_loss_2d.2} parent=5 // pred_check
      %p150 = pneg %p149
    $region14: #{lovasz_loss_2d.2} parent=5 // pred_check_branch
      %152 = sbr.rel (%p150) target = $region16
    $region15: #{lovasz_loss_2d.2} parent=5 // pred_region
      // Predicated region
      $region17: #{lovasz_loss_2d.2} parent=15 // pred_check
        %p153 = pneg %p44
      $region18: #{lovasz_loss_2d.2} parent=15 // pred_check_branch
        %155 = sbr.rel (%p153) target = $region20
      $region19: #{lovasz_loss_2d.2} parent=15 // pred_region
        %s156 = smul.u32 2, %s18
        %p157 = scmp.lt.s32.totalorder %s17, 1
        %s158 = scalar_select %p157, %s17, 1
        %p159 = scmp.lt.s32.totalorder %s156, 1
        %s160 = scalar_select %p159, %s156, 1
        %s161 = smul.addr %s158, 2
        %s162 = sadd.s32 %s160, %s161
        %s163 = smul.addr %s162, 4
        %s164 = scalar_lea.vmem %s0, %s163
        %s165 = smul.u32 2, %s18
      $region20: #{lovasz_loss_2d.2} parent=15 // pred_fallthru
        _
      // Predicated region
      $region21: #{lovasz_loss_2d.2} parent=15 // pred_check
        %p166 = pneg %p72
      $region22: #{lovasz_loss_2d.2} parent=15 // pred_check_branch
        %168 = sbr.rel (%p166) target = $region24
      $region23: #{lovasz_loss_2d.2} parent=15 // pred_region
        %s169 = smul.u32 2, %s18
        %p170 = scmp.lt.s32.totalorder %s17, 1
        %s171 = scalar_select %p170, %s17, 1
        %p172 = scmp.lt.s32.totalorder %s169, 1
        %s173 = scalar_select %p172, %s169, 1
        %s174 = smul.addr %s171, 2
        %s175 = sadd.s32 %s173, %s174
        %s176 = scalar_lea.vmem %s1, %s175
        %s177 = smul.u32 2, %s18
      $region24: #{lovasz_loss_2d.2} parent=15 // pred_fallthru
        _
    $region16: #{lovasz_loss_2d.2} parent=5 // pred_fallthru
      _
    %p178 = scmp.le.s32.totalorder 1, %s10
    %p179 = scmp.lt.s32.totalorder %s10, 3
    %p180 = pnand %p178, %p179
    %p181 = pneg %p180
    // Predicated region
    $region25: #{lovasz_loss_2d.2} parent=5 // pred_check
      _
    $region26: #{lovasz_loss_2d.2} parent=5 // pred_check_branch
      %183 = sbr.rel (%p180) target = $region28
    $region27: #{lovasz_loss_2d.2} parent=5 // pred_region
      %s184 = ssub.s32 %s10, 1
      %s185 = smul.u32 2, %s20
      %p186 = scmp.lt.s32.totalorder %s19, 1
      %s187 = scalar_select %p186, %s19, 1
      %p188 = scmp.lt.s32.totalorder %s185, 1
      %s189 = scalar_select %p188, %s185, 1
      %s190 = smul.addr %s187, 2
      %s191 = sadd.s32 %s189, %s190
      %s192 = smul.addr %s191, 4
      %s193 = scalar_lea.vmem %s0, %s192
      %p194 = pneg %p50
      %p195 = pneg %p47
      %s196 = smul.u32 2, %s20
      %p197 = scmp.lt.s32.totalorder %s19, 1
      %s198 = scalar_select %p197, %s19, 1
      %p199 = scmp.lt.s32.totalorder %s196, 1
      %s200 = scalar_select %p199, %s196, 1
      %s201 = smul.addr %s198, 2
      %s202 = sadd.s32 %s200, %s201
      %s203 = scalar_lea.vmem %s1, %s202
      %p204 = pneg %p78
      %p205 = pneg %p75
      %p206 = pneg %p106
      %p207 = pneg %p103
      %s208 = smul.u32 2, %s20
      %p209 = scmp.lt.s32.totalorder %s19, 1
      %s210 = scalar_select %p209, %s19, 1
      %p211 = scmp.lt.s32.totalorder %s208, 1
      %s212 = scalar_select %p211, %s208, 1
      %s213 = smul.addr %s210, 2
      %s214 = sadd.s32 %s212, %s213
      %s215 = smul.addr %s214, 4
      %s216 = scalar_lea.vmem %s2, %s215
      %p217 = pneg %p134
      %p218 = pneg %p131
      %s219 = smul.u32 2, %s20
      %p220 = scmp.lt.s32.totalorder %s19, 1
      %s221 = scalar_select %p220, %s19, 1
      %p222 = scmp.lt.s32.totalorder %s219, 1
      %s223 = scalar_select %p222, %s219, 1
      %s224 = smul.addr %s221, 2
      %s225 = sadd.s32 %s223, %s224
      %s226 = scalar_lea.vmem %s3, %s225
      %s227 = smul.u32 2, %s20
      %p228 = scmp.lt.s32.totalorder %s19, 1
      %s229 = scalar_select %p228, %s19, 1
      %p230 = scmp.lt.s32.totalorder %s227, 1
      %s231 = scalar_select %p230, %s227, 1
      %s232 = smul.addr %s229, 2
      %s233 = sadd.s32 %s231, %s232
      %s234 = smul.addr %s233, 4
      %s235 = scalar_lea.vmem %s0, %s234
      %s236 = smul.u32 2, %s20
      %s237 = smul.u32 2, %s20
      %p238 = scmp.lt.s32.totalorder %s19, 1
      %s239 = scalar_select %p238, %s19, 1
      %p240 = scmp.lt.s32.totalorder %s237, 1
      %s241 = scalar_select %p240, %s237, 1
      %s242 = smul.addr %s239, 2
      %s243 = sadd.s32 %s241, %s242
      %s244 = scalar_lea.vmem %s1, %s243
      %s245 = smul.u32 2, %s20
      %s246 = smul.u32 2, %s20
      %p247 = scmp.lt.s32.totalorder %s19, 1
      %s248 = scalar_select %p247, %s19, 1
      %p249 = scmp.lt.s32.totalorder %s246, 1
      %s250 = scalar_select %p249, %s246, 1
      %s251 = smul.addr %s248, 2
      %s252 = sadd.s32 %s250, %s251
      %s253 = smul.addr %s252, 4
      %s254 = scalar_lea.vmem %s2, %s253
      %s255 = smul.u32 2, %s20
      %s256 = smul.u32 2, %s20
      %p257 = scmp.lt.s32.totalorder %s19, 1
      %s258 = scalar_select %p257, %s19, 1
      %p259 = scmp.lt.s32.totalorder %s256, 1
      %s260 = scalar_select %p259, %s256, 1
      %s261 = smul.addr %s258, 2
      %s262 = sadd.s32 %s260, %s261
      %s263 = scalar_lea.vmem %s3, %s262
      %s264 = smul.u32 2, %s20
      %v267 = vld [vmem:[%s235] sm:$0xff]
      %v268 = vld [vmem:[%s244] sm:$0x3]
      %v269 = vlaneseq
      %v270 = vshrl.u32 %v269, 7
      %v271 = vlaneseq
      %v272 = vshrl.u32 %v271, 7
      %v273 = vsub.s32 0, %v272
      %v274 = vrot.slane %v268, %v273
      %v275 = vlaneseq
      %v276 = vshrl.u32 %v275, 7
      %v277 = vsub.s32 1, %v276
      %v278 = vrot.slane %v268, %v277
      %vm279 = vcmp.eq.s32.totalorder %v270, %v274
      %vm280 = vcmp.eq.s32.totalorder %v270, %v278
      %v281 = vsub.f32 0.0, %v267
      %v283 = vcombine.high %v267, %v267
      %v286 = vcombine.high %v281, %v281
      %v288 = vsel %vm279, %v267, %v281
      %v289 = vsel %vm280, %v283, %v286
      %v290 = vsub.f32 %v288, 1.0
      %v291 = vsub.f32 %v289, 1.0
      %v294 = vcombine.low %v290, %v291
      %296 = vst [vmem:[%s254] sm:$0xff] %v294
      %vm297 = vmpackc.low %vm279, %vm279
      %vm298 = vmpackc.even %vm297, %vm297
      %vm299 = vmpackc.low %vm280, %vm280
      %vm300 = vmpackc.even %vm299, %vm299
      %v301 = vsel %vm298, 16843009, 0
      %v302 = vsel %vm300, 16843009, 0
      %v303 = vcombine.low %v301, %v302
      %v305 = vunpack.c.l.s4 1966171168
      %v306 = vunpack.c.0.s8 %v305
      %v307 = vlaneseq
      %v308 = vshrl.u32 %v307, 7
      %v309 = vsub.s32 %v306, %v308
      %v310 = vrot.slane %v303, %v309
      %v312 = vunpack.c.l.s4 1966171168
      %v313 = vunpack.c.0.s8 %v312
      %v314 = vlaneseq
      %v315 = vshrl.u32 %v314, 7
      %v316 = vsub.s32 %v313, %v315
      %v317 = vrot.slane %v310, %v316
      %318 = vst [vmem:[%s263] sm:$0x3] %v317
      %s319 = smul.u32 2, %s20
      %p320 = scmp.lt.s32.totalorder %s19, 1
      %s321 = scalar_select %p320, %s19, 1
      %p322 = scmp.lt.s32.totalorder %s319, 1
      %s323 = scalar_select %p322, %s319, 1
      %s324 = smul.addr %s321, 2
      %s325 = sadd.s32 %s323, %s324
      %s326 = smul.addr %s325, 4
      %s327 = scalar_lea.vmem %s2, %s326
      %s328 = smul.u32 2, %s20
      %p329 = scmp.lt.s32.totalorder %s19, 1
      %s330 = scalar_select %p329, %s19, 1
      %p331 = scmp.lt.s32.totalorder %s328, 1
      %s332 = scalar_select %p331, %s328, 1
      %s333 = smul.addr %s330, 2
      %s334 = sadd.s32 %s332, %s333
      %s335 = scalar_lea.vmem %s3, %s334
      // Predicated region
      $region29: #{lovasz_loss_2d.2} parent=27 // pred_check
        %p336 = pneg %p103
      $region30: #{lovasz_loss_2d.2} parent=27 // pred_check_branch
        %338 = sbr.rel (%p336) target = $region32
      $region31: #{lovasz_loss_2d.2} parent=27 // pred_region
        %s339 = smul.u32 2, %s20
      $region32: #{lovasz_loss_2d.2} parent=27 // pred_fallthru
        _
      // Predicated region
      $region33: #{lovasz_loss_2d.2} parent=27 // pred_check
        %p340 = pneg %p131
      $region34: #{lovasz_loss_2d.2} parent=27 // pred_check_branch
        %342 = sbr.rel (%p340) target = $region36
      $region35: #{lovasz_loss_2d.2} parent=27 // pred_region
        %s343 = smul.u32 2, %s20
      $region36: #{lovasz_loss_2d.2} parent=27 // pred_fallthru
        _
    $region28: #{lovasz_loss_2d.2} parent=5 // pred_fallthru
      _
    %p344 = scmp.le.s32.totalorder 2, %s10
    // Predicated region
    $region37: #{lovasz_loss_2d.2} parent=5 // pred_check
      %p345 = pneg %p344
    $region38: #{lovasz_loss_2d.2} parent=5 // pred_check_branch
      %347 = sbr.rel (%p345) target = $region40
    $region39: #{lovasz_loss_2d.2} parent=5 // pred_region
      %s348 = ssub.s32 %s10, 2
      // Predicated region
      $region41: #{lovasz_loss_2d.2} parent=39 // pred_check
        %p349 = pneg %p109
      $region42: #{lovasz_loss_2d.2} parent=39 // pred_check_branch
        %351 = sbr.rel (%p349) target = $region44
      $region43: #{lovasz_loss_2d.2} parent=39 // pred_region
        %s352 = smul.u32 2, %s22
        %p353 = scmp.lt.s32.totalorder %s21, 1
        %s354 = scalar_select %p353, %s21, 1
        %p355 = scmp.lt.s32.totalorder %s352, 1
        %s356 = scalar_select %p355, %s352, 1
        %s357 = smul.addr %s354, 2
        %s358 = sadd.s32 %s356, %s357
        %s359 = smul.addr %s358, 4
        %s360 = scalar_lea.vmem %s2, %s359
      $region44: #{lovasz_loss_2d.2} parent=39 // pred_fallthru
        _
      // Predicated region
      $region45: #{lovasz_loss_2d.2} parent=39 // pred_check
        %p361 = pneg %p137
      $region46: #{lovasz_loss_2d.2} parent=39 // pred_check_branch
        %363 = sbr.rel (%p361) target = $region48
      $region47: #{lovasz_loss_2d.2} parent=39 // pred_region
        %s364 = smul.u32 2, %s22
        %p365 = scmp.lt.s32.totalorder %s21, 1
        %s366 = scalar_select %p365, %s21, 1
        %p367 = scmp.lt.s32.totalorder %s364, 1
        %s368 = scalar_select %p367, %s364, 1
        %s369 = smul.addr %s366, 2
        %s370 = sadd.s32 %s368, %s369
        %s371 = scalar_lea.vmem %s3, %s370
      $region48: #{lovasz_loss_2d.2} parent=39 // pred_fallthru
        _
    $region40: #{lovasz_loss_2d.2} parent=5 // pred_fallthru
      _
  $region6: #{lovasz_loss_2d.2} parent=0 // loop_footer
    %s14 = sadd.s32 1, %s10
  $region7: #{lovasz_loss_2d.2} parent=0 // loop_footer_branch
    %9 = sbr.rel target = $region3
  $region8: #{lovasz_loss_2d.2} parent=0 // loop_exit
    _

// kernel: lovasz_loss_2d.3
$region0: #{lovasz_loss_2d.3}
  #allocation0 [shape = 'u32[]', space=smem, size = 0x4, offset = 0x4, fixed_abs, tag = 'smem constant byte address 0x4 - core index']
  #allocation1 [shape = 'u32[144,128]{1,0:T(1,128)}', space=vmem, size = 0x12000, scoped, tag = 'internal scratch']
  #allocation2 [shape = 'f32[2,1,1]{2,1,0:T(1,128)}', space=vmem, size = 0x400, scoped, tag = 'scratch operand']
  #allocation3 [shape = 'f32[2,8,1]{2,1,0:T(8,128)}', space=vmem, size = 0x2000, scoped, tag = 'scratch operand']
  #allocation4 [shape = 'f32[1,1]{1,0:T(1,128)}', space=vmem, size = 0x200, scoped, tag = 'scratch operand']
  %s0 = inlined_call_operand.vmem [shape: f32[2,8,128], index: 0, kind: input, shape index: {}]
  %s1 = inlined_call_operand.vmem [shape: s8[2,8,128], index: 1, kind: input, shape index: {}]
  %s2 = inlined_call_operand.hbm [shape: f32[1,1], index: 2, kind: output, shape index: {}]
  %s3 = sld [smem:[#allocation0]]
  $region26: #{lovasz_loss_2d.3} parent=0
    _
  %s5 = ssub.s32 1, %s3
  %s6 = scalar_select 0, %s5, %s3
  $region1: #{lovasz_loss_2d.3} parent=0
    #allocation5 [shape = 'u8[512]{0}', space=vmem, size = 0x400, scoped, tag = 'output window, operand 0, single buffered']
    #allocation6 [shape = 's32[1]{0}', space=sflag, size = 0x4, scoped, tag = 'scoped memory for lovasz_loss_2d.3']
    %7 = vsyncpa [#allocation6], 0
    // Predicated region
    $region2: #{lovasz_loss_2d.3} parent=1 // pred_check
      _
    $region3: #{lovasz_loss_2d.3} parent=1 // pred_check_branch
      %9 = sbr.rel (0) target = $region5
    $region4: #{lovasz_loss_2d.3} parent=1 // pred_region
      _
    $region5: #{lovasz_loss_2d.3} parent=1 // pred_fallthru
      _
    // Predicated region
    $region6: #{lovasz_loss_2d.3} parent=1 // pred_check
      _
    $region7: #{lovasz_loss_2d.3} parent=1 // pred_check_branch
      %11 = sbr.rel (0) target = $region9
    $region8: #{lovasz_loss_2d.3} parent=1 // pred_region
      _
    $region9: #{lovasz_loss_2d.3} parent=1 // pred_fallthru
      _
    %p13 = scmp.eq.s32.totalorder 0, 0
    // Predicated region
    $region10: #{lovasz_loss_2d.3} parent=1 // pred_check
      %p14 = pneg %p13
    $region11: #{lovasz_loss_2d.3} parent=1 // pred_check_branch
      %16 = sbr.rel (%p14) target = $region13
    $region12: #{lovasz_loss_2d.3} parent=1 // pred_region
      %vm17 = vcmask 0
      %18 = vst.msk [vmem:[#allocation2] sm:$0x1] %vm17, 0.0
      %19 = vst.msk [vmem:[#allocation2 + $0x1] sm:$0x1] %vm17, 0.0
      %20 = vst.msk [vmem:[#allocation4] sm:$0x1] %vm17, 0.0
    $region13: #{lovasz_loss_2d.3} parent=1 // pred_fallthru
      _
    %v21 = vld [vmem:[%s1] sm:$0x3]
    %v22 = vld [vmem:[%s1 + $0x2] sm:$0x3]
    %v23 = vunpack.c.0.s8 %v21
    %v24 = vunpack.c.0.s8 %v22
    %v25 = vcvt.s32.f32 %v23
    %v26 = vcvt.s32.f32 %v24
    %v27 = vld [vmem:[%s0] sm:$0xff]
    %v28 = vld [vmem:[%s0 + $0x8] sm:$0xff]
    %v29 = vlaneseq
    %v30 = vshrl.u32 %v29, 7
    %v31 = vadd.s32 %v30, 8
    %v32 = vadd.s32 %v30, 16
    %v33 = vadd.s32 %v30, 24
    %v34 = vadd.s32 %v30, 32
    %v35 = vadd.s32 %v30, 40
    %v36 = vadd.s32 %v30, 48
    %v37 = vadd.s32 %v30, 56
    %v38 = vadd.s32 %v30, 64
    %v39 = vadd.s32 %v30, 72
    %v40 = vadd.s32 %v30, 80
    %v41 = vadd.s32 %v30, 88
    %v42 = vadd.s32 %v30, 96
    %v43 = vadd.s32 %v30, 104
    %v44 = vadd.s32 %v30, 112
    %v45 = vadd.s32 %v30, 120
    %v46 = vlaneseq
    %v47 = vand.u32 %v46, 127
    %vm48 = vcmp.le.s32.totalorder %v30, %v47
    %vm49 = vcmp.le.s32.totalorder %v31, %v47
    %vm50 = vcmp.le.s32.totalorder %v32, %v47
    %vm51 = vcmp.le.s32.totalorder %v33, %v47
    %vm52 = vcmp.le.s32.totalorder %v34, %v47
    %vm53 = vcmp.le.s32.totalorder %v35, %v47
    %vm54 = vcmp.le.s32.totalorder %v36, %v47
    %vm55 = vcmp.le.s32.totalorder %v37, %v47
    %vm56 = vcmp.le.s32.totalorder %v38, %v47
    %vm57 = vcmp.le.s32.totalorder %v39, %v47
    %vm58 = vcmp.le.s32.totalorder %v40, %v47
    %vm59 = vcmp.le.s32.totalorder %v41, %v47
    %vm60 = vcmp.le.s32.totalorder %v42, %v47
    %vm61 = vcmp.le.s32.totalorder %v43, %v47
    %vm62 = vcmp.le.s32.totalorder %v44, %v47
    %vm63 = vcmp.le.s32.totalorder %v45, %v47
    %v64 = vsel %vm48, 1, 0
    %v65 = vsel %vm49, 1, 0
    %v66 = vsel %vm50, 1, 0
    %v67 = vsel %vm51, 1, 0
    %v68 = vsel %vm52, 1, 0
    %v69 = vsel %vm53, 1, 0
    %v70 = vsel %vm54, 1, 0
    %v71 = vsel %vm55, 1, 0
    %v72 = vsel %vm56, 1, 0
    %v73 = vsel %vm57, 1, 0
    %v74 = vsel %vm58, 1, 0
    %v75 = vsel %vm59, 1, 0
    %v76 = vsel %vm60, 1, 0
    %v77 = vsel %vm61, 1, 0
    %v78 = vsel %vm62, 1, 0
    %v79 = vsel %vm63, 1, 0
    %v80 = vcvt.s32.f32 %v64
    %v81 = vcvt.s32.f32 %v65
    %v82 = vcvt.s32.f32 %v66
    %v83 = vcvt.s32.f32 %v67
    %v84 = vcvt.s32.f32 %v68
    %v85 = vcvt.s32.f32 %v69
    %v86 = vcvt.s32.f32 %v70
    %v87 = vcvt.s32.f32 %v71
    %v88 = vcvt.s32.f32 %v72
    %v89 = vcvt.s32.f32 %v73
    %v90 = vcvt.s32.f32 %v74
    %v91 = vcvt.s32.f32 %v75
    %v92 = vcvt.s32.f32 %v76
    %v93 = vcvt.s32.f32 %v77
    %v94 = vcvt.s32.f32 %v78
    %v95 = vcvt.s32.f32 %v79
    %v96 = vpack.c.bf16 %v81, %v80
    %v97 = vpack.c.bf16 %v83, %v82
    %v98 = vpack.c.bf16 %v85, %v84
    %v99 = vpack.c.bf16 %v87, %v86
    %v100 = vpack.c.bf16 %v89, %v88
    %v101 = vpack.c.bf16 %v91, %v90
    %v102 = vpack.c.bf16 %v93, %v92
    %v103 = vpack.c.bf16 %v95, %v94
    %v104 = vunpack.c.l.s8.bf16 %v21
    %v105 = vunpack.c.l.s8.bf16 %v22
    %106 = vmatprep.subr.bf16.mxu0 0
    %107 = vmatpush1.bf16.msra.mxu0 %v103
    %108 = vmatprep.subr.bf16.mxu0 0
    %109 = vmatpush1.bf16.msra.mxu0 %v102
    %110 = vmatprep.subr.bf16.mxu0 0
    %111 = vmatpush1.bf16.msra.mxu0 %v101
    %112 = vmatprep.subr.bf16.mxu0 0
    %113 = vmatpush1.bf16.msra.mxu0 %v100
    %114 = vmatprep.subr.bf16.mxu0 0
    %115 = vmatpush1.bf16.msra.mxu0 %v99
    %116 = vmatprep.subr.bf16.mxu0 0
    %117 = vmatpush1.bf16.msra.mxu0 %v98
    %118 = vmatprep.subr.bf16.mxu0 0
    %119 = vmatpush1.bf16.msra.mxu0 %v97
    %120 = vmatprep.subr.bf16.mxu0 0
    %121 = vmatpush1.bf16.msra.mxu0 %v96
    %122 = vmatprep.subr.bf16.mxu0 0
    %123 = vmatpush2.bf16.msra.mxu0 0
    %124 = vmatprep.subr.bf16.mxu0 0
    %125 = vmatpush2.bf16.msra.mxu0 0
    %126 = vmatprep.subr.bf16.mxu0 0
    %127 = vmatpush2.bf16.msra.mxu0 0
    %128 = vmatprep.subr.bf16.mxu0 0
    %129 = vmatpush2.bf16.msra.mxu0 0
    %130 = vmatprep.subr.bf16.mxu0 0
    %131 = vmatpush2.bf16.msra.mxu0 0
    %132 = vmatprep.subr.bf16.mxu0 0
    %133 = vmatpush2.bf16.msra.mxu0 0
    %134 = vmatprep.subr.bf16.mxu0 0
    %135 = vmatpush2.bf16.msra.mxu0 0
    %136 = vmatprep.subr.bf16.mxu0 0
    %137 = vmatpush2.bf16.msra.mxu0 0
    %138 = vmatprep.mubr.bf16.mxu0 0
    %139 = vmatmul.mubr.bf16.gmra.mxu0 %v104
    %v140 = vpop.f32.mrf.mxu0
    %v141 = vadd.f32 0.0, %v140
    %v142 = vpop.f32.mrf.mxu0
    %v143 = vpop.f32.mrf.mxu0
    %v144 = vpop.f32.mrf.mxu0
    %145 = vdwg.mxu0
    %146 = vmatprep.subr.bf16.mxu0 0
    %147 = vmatpush1.bf16.msra.mxu0 %v103
    %148 = vmatprep.subr.bf16.mxu0 0
    %149 = vmatpush1.bf16.msra.mxu0 %v102
    %150 = vmatprep.subr.bf16.mxu0 0
    %151 = vmatpush1.bf16.msra.mxu0 %v101
    %152 = vmatprep.subr.bf16.mxu0 0
    %153 = vmatpush1.bf16.msra.mxu0 %v100
    %154 = vmatprep.subr.bf16.mxu0 0
    %155 = vmatpush1.bf16.msra.mxu0 %v99
    %156 = vmatprep.subr.bf16.mxu0 0
    %157 = vmatpush1.bf16.msra.mxu0 %v98
    %158 = vmatprep.subr.bf16.mxu0 0
    %159 = vmatpush1.bf16.msra.mxu0 %v97
    %160 = vmatprep.subr.bf16.mxu0 0
    %161 = vmatpush1.bf16.msra.mxu0 %v96
    %162 = vmatprep.subr.bf16.mxu0 0
    %163 = vmatpush2.bf16.msra.mxu0 0
    %164 = vmatprep.subr.bf16.mxu0 0
    %165 = vmatpush2.bf16.msra.mxu0 0
    %166 = vmatprep.subr.bf16.mxu0 0
    %167 = vmatpush2.bf16.msra.mxu0 0
    %168 = vmatprep.subr.bf16.mxu0 0
    %169 = vmatpush2.bf16.msra.mxu0 0
    %170 = vmatprep.subr.bf16.mxu0 0
    %171 = vmatpush2.bf16.msra.mxu0 0
    %172 = vmatprep.subr.bf16.mxu0 0
    %173 = vmatpush2.bf16.msra.mxu0 0
    %174 = vmatprep.subr.bf16.mxu0 0
    %175 = vmatpush2.bf16.msra.mxu0 0
    %176 = vmatprep.subr.bf16.mxu0 0
    %177 = vmatpush2.bf16.msra.mxu0 0
    %178 = vmatprep.mubr.bf16.mxu0 0
    %179 = vmatmul.mubr.bf16.gmra.mxu0 %v105
    %v180 = vpop.f32.mrf.mxu0
    %v181 = vadd.f32 0.0, %v180
    %v182 = vpop.f32.mrf.mxu0
    %v183 = vpop.f32.mrf.mxu0
    %v184 = vpop.f32.mrf.mxu0
    %185 = vdwg.mxu0
    %186 = vadd.xlane.f32.xlu0 %v25
    %v187 = vpop.xlane.xlu0 %186
    %188 = vadd.xlane.f32.xlu0 %v26
    %v189 = vpop.xlane.xlu0 %188
    %v190 = vld [vmem:[#allocation2] sm:$0x1]
    %v191 = vld [vmem:[#allocation2 + $0x1] sm:$0x1]
    %vm192 = vcmask 0
    %193 = vst.msk [vmem:[#allocation3] sm:$0x1] %vm192, %v190
    %194 = vst.msk [vmem:[#allocation3 + $0x8] sm:$0x1] %vm192, %v191
    %v195 = vadd.f32 %v190, %v187
    %v196 = vadd.f32 %v191, %v189
    %197 = vst.msk [vmem:[#allocation3 + $0x1] sm:$0x1] %vm192, %v195
    %198 = vst.msk [vmem:[#allocation3 + $0x9] sm:$0x1] %vm192, %v196
    %v201 = vlaneseq
    %v202 = vshrl.u32 %v201, 7
    %v203 = vsub.s32 1, %v202
    %v204 = vrot.slane %v187, %v203
    %v205 = vlaneseq
    %v206 = vshrl.u32 %v205, 7
    %v207 = vsub.s32 1, %v206
    %v208 = vrot.slane %v189, %v207
    %v211 = vadd.f32 %v195, %v204
    %v212 = vadd.f32 %v196, %v208
    %213 = vst.msk [vmem:[#allocation3 + $0x2] sm:$0x1] %vm192, %v211
    %214 = vst.msk [vmem:[#allocation3 + $0xa] sm:$0x1] %vm192, %v212
    %v215 = vlaneseq
    %v216 = vshrl.u32 %v215, 7
    %v217 = vsub.s32 2, %v216
    %v218 = vrot.slane %v187, %v217
    %v219 = vlaneseq
    %v220 = vshrl.u32 %v219, 7
    %v221 = vsub.s32 2, %v220
    %v222 = vrot.slane %v189, %v221
    %v225 = vadd.f32 %v211, %v218
    %v226 = vadd.f32 %v212, %v222
    %227 = vst.msk [vmem:[#allocation3 + $0x3] sm:$0x1] %vm192, %v225
    %228 = vst.msk [vmem:[#allocation3 + $0xb] sm:$0x1] %vm192, %v226
    %v229 = vlaneseq
    %v230 = vshrl.u32 %v229, 7
    %v231 = vsub.s32 3, %v230
    %v232 = vrot.slane %v187, %v231
    %v233 = vlaneseq
    %v234 = vshrl.u32 %v233, 7
    %v235 = vsub.s32 3, %v234
    %v236 = vrot.slane %v189, %v235
    %v239 = vadd.f32 %v225, %v232
    %v240 = vadd.f32 %v226, %v236
    %241 = vst.msk [vmem:[#allocation3 + $0x4] sm:$0x1] %vm192, %v239
    %242 = vst.msk [vmem:[#allocation3 + $0xc] sm:$0x1] %vm192, %v240
    %v243 = vlaneseq
    %v244 = vshrl.u32 %v243, 7
    %v245 = vsub.s32 4, %v244
    %v246 = vrot.slane %v187, %v245
    %v247 = vlaneseq
    %v248 = vshrl.u32 %v247, 7
    %v249 = vsub.s32 4, %v248
    %v250 = vrot.slane %v189, %v249
    %v253 = vadd.f32 %v239, %v246
    %v254 = vadd.f32 %v240, %v250
    %255 = vst.msk [vmem:[#allocation3 + $0x5] sm:$0x1] %vm192, %v253
    %256 = vst.msk [vmem:[#allocation3 + $0xd] sm:$0x1] %vm192, %v254
    %v257 = vlaneseq
    %v258 = vshrl.u32 %v257, 7
    %v259 = vsub.s32 5, %v258
    %v260 = vrot.slane %v187, %v259
    %v261 = vlaneseq
    %v262 = vshrl.u32 %v261, 7
    %v263 = vsub.s32 5, %v262
    %v264 = vrot.slane %v189, %v263
    %v267 = vadd.f32 %v253, %v260
    %v268 = vadd.f32 %v254, %v264
    %269 = vst.msk [vmem:[#allocation3 + $0x6] sm:$0x1] %vm192, %v267
    %270 = vst.msk [vmem:[#allocation3 + $0xe] sm:$0x1] %vm192, %v268
    %v271 = vlaneseq
    %v272 = vshrl.u32 %v271, 7
    %v273 = vsub.s32 6, %v272
    %v274 = vrot.slane %v187, %v273
    %v275 = vlaneseq
    %v276 = vshrl.u32 %v275, 7
    %v277 = vsub.s32 6, %v276
    %v278 = vrot.slane %v189, %v277
    %v281 = vadd.f32 %v267, %v274
    %v282 = vadd.f32 %v268, %v278
    %283 = vst.msk [vmem:[#allocation3 + $0x7] sm:$0x1] %vm192, %v281
    %284 = vst.msk [vmem:[#allocation3 + $0xf] sm:$0x1] %vm192, %v282
    %v285 = vlaneseq
    %v286 = vshrl.u32 %v285, 7
    %v287 = vsub.s32 7, %v286
    %v288 = vrot.slane %v187, %v287
    %v289 = vlaneseq
    %v290 = vshrl.u32 %v289, 7
    %v291 = vsub.s32 7, %v290
    %v292 = vrot.slane %v189, %v291
    %v295 = vadd.f32 %v281, %v288
    %v296 = vadd.f32 %v282, %v292
    %297 = vst.msk [vmem:[#allocation2] sm:$0x1] %vm192, %v295
    %298 = vst.msk [vmem:[#allocation2 + $0x1] sm:$0x1] %vm192, %v296
    %v299 = vld [vmem:[#allocation3] sm:$0xff]
    %v300 = vld [vmem:[#allocation3 + $0x8] sm:$0xff]
    %302 = vset.pattern.permute.xlu0 0
    %303 = vperm.xlu0 %302, %v299
    %v304 = vpop.permute.xlu0 %303
    %307 = vset.pattern.permute.xlu0 0
    %308 = vperm.xlu0 %307, %v300
    %v309 = vpop.permute.xlu0 %308
    %v311 = vadd.f32 %v304, %v141
    %v312 = vadd.f32 %v309, %v181
    %s313 = smul.u32 0, 1024
    %v314 = vmul.u32 %v30, 128
    %v315 = vstv %s313
    %v316 = vadd.s32 %v315, %v314
    %v317 = vadd.s32 %v316, %v47
    %v318 = vadd.s32 %v317, 1
    %v319 = vcvt.s32.f32 %v318
    %v320 = vsub.f32 256.0, %v311
    %v321 = vsub.f32 256.0, %v312
    %v322 = vsub.f32 %v319, %v311
    %v323 = vsub.f32 %v319, %v312
    %v324 = vadd.f32 %v322, 256.0
    %v325 = vadd.f32 %v323, 256.0
    %v326 = vrcp.pop %v324
    %v327 = vmul.f32 %v320, %v326
    %v328 = vrcp.pop %v325
    %v329 = vmul.f32 %v321, %v328
    %v330 = vsub.f32 1.0, %v327
    %v331 = vsub.f32 1.0, %v329
    %v332 = vadd.f32 %v320, %v25
    %v333 = vadd.f32 %v321, %v26
    %v334 = vsub.f32 1.0, %v25
    %v335 = vsub.f32 1.0, %v26
    %v336 = vsub.f32 %v324, %v334
    %v337 = vsub.f32 %v325, %v335
    %v338 = vrcp.pop %v336
    %v339 = vmul.f32 %v332, %v338
    %v340 = vrcp.pop %v337
    %v341 = vmul.f32 %v333, %v340
    %v342 = vsub.f32 1.0, %v339
    %v343 = vsub.f32 1.0, %v341
    %v344 = vsub.f32 %v330, %v342
    %v345 = vsub.f32 %v331, %v343
    %v346 = vld [vmem:[#allocation4] sm:$0x1]
    %v347 = vsub.f32 0.0, %v27
    %v348 = vsub.f32 0.0, %v28
    %v349 = vmax.f32 %v347, 0.0
    %v350 = vmax.f32 %v348, 0.0
    %v351 = vmul.f32 %v349, %v344
    %v352 = vmul.f32 %v350, %v345
    %v353 = vadd.f32 %v351, %v352
    %354 = vadd.xlane.f32.xlu0 %v353
    %v355 = vpop.xlane.xlu0 %354
    %v356 = vrot.slane %v355, 4
    %v357 = vadd.f32 %v355, %v356
    %v358 = vrot.slane %v357, 2
    %v359 = vadd.f32 %v357, %v358
    %v360 = vrot.slane %v359, 1
    %v361 = vadd.f32 %v359, %v360
    %s362 = vtos %v361
    %v363 = vstv %s362
    %v364 = vadd.f32 %v346, %v363
    %365 = vst.msk [vmem:[#allocation4] sm:$0x1] %vm192, %v364
    // Predicated region
    $region14: #{lovasz_loss_2d.3} parent=1 // pred_check
      %p366 = pneg %p13
    $region15: #{lovasz_loss_2d.3} parent=1 // pred_check_branch
      %368 = sbr.rel (%p366) target = $region17
    $region16: #{lovasz_loss_2d.3} parent=1 // pred_region
      %v369 = vld [vmem:[#allocation4] sm:$0x1]
      %v370 = vmul.f32 %v369, 0.5
      %371 = vst.msk [vmem:[#allocation5] sm:$0x1] %vm192, %v370
    $region17: #{lovasz_loss_2d.3} parent=1 // pred_fallthru
      _
    // Predicated region
    $region18: #{lovasz_loss_2d.3} parent=1 // pred_check
      _
    $region19: #{lovasz_loss_2d.3} parent=1 // pred_check_branch
      %373 = sbr.rel (0) target = $region21
    $region20: #{lovasz_loss_2d.3} parent=1 // pred_region
      %s375 = ssub.s32 16, 16
      %376 = vsyncadd [#allocation6], %s375
      %s378 = sshll.u32 [#allocation5], 4
      %s379 = int_to_ptr.vmem [resolvable:$true] %s378
      %381 = dma.vmem_to_hbm [thread:$0]  %s379, 16, %s2, [#allocation6]
    $region21: #{lovasz_loss_2d.3} parent=1 // pred_fallthru
      _
    // Predicated region
    $region22: #{lovasz_loss_2d.3} parent=1 // pred_check
      _
    $region23: #{lovasz_loss_2d.3} parent=1 // pred_check_branch
      %383 = sbr.rel (0) target = $region25
    $region24: #{lovasz_loss_2d.3} parent=1 // pred_region
      %384 = dma.done [#allocation6], 16
    $region25: #{lovasz_loss_2d.3} parent=1 // pred_fallthru
      _
    %385 = vsyncpa [#allocation6], 1

</llo_original>
